<compile_context>
chip_gen: v7x
topology: tpu7x:2x2x1
jax: 0.10.0
libtpu: 0.0.40
codegen_flags: <defaults>
</compile_context>

<pallas_src>
import functools

import jax
import jax.numpy as jnp
from jax.experimental import pallas as pl
from jax.experimental.pallas import tpu as pltpu

_LANES = 128
_SUBLANES = 8
_MAX_GROUP_ROWS = 256          # rows folded per inner-loop step (256x128 f32 = 128 KiB)


def _round_up(v, m):
    return -(-v // m) * m


@functools.lru_cache(maxsize=None)
def _chip_config():
    """(num TensorCores usable via the 'parallel' axis, default max block rows)."""
    kind = ""
    try:
        kind = jax.devices()[0].device_kind.lower()
    except Exception:
        pass
    # Megacore chips: leading "parallel" grid axis is sharded across 2 TensorCores.
    num_tc = 2 if any(t in kind for t in ("v7", "v5p", "v4")) else 1
    # Bigger blocks on high-bandwidth chips (16 MiB live with double buffering); keep
    # 4096 rows (8 MiB live) elsewhere so v5e's 16 MiB scoped-VMEM default still fits.
    max_block_rows = 8192 if ("v6" in kind or "v7" in kind) else 4096
    return num_tc, max_block_rows


def _pick_group_rows(block_rows, sub_mult):
    """Largest multiple of sub_mult that divides block_rows and is <= _MAX_GROUP_ROWS."""
    best = sub_mult
    g = sub_mult
    cap = min(_MAX_GROUP_ROWS, block_rows)
    while g <= cap:
        if block_rows % g == 0:
            best = g
        g += sub_mult
    return best


def _sum_sq_diff_kernel(x_ref, t_ref, out_ref, *, block_rows, group_rows, num_blocks,
                        steps_per_partial, valid_rows_last, mask_last):
    """Fold sum((x - t)^2) of one (block_rows, 128) block into a resident (8, 128) block."""
    p = pl.program_id(0)            # partial / TensorCore index ("parallel")
    i = pl.program_id(1)            # sequential reduction step ("arbitrary")

    @pl.when(i == 0)
    def _():
        out_ref[...] = jnp.zeros_like(out_ref)

    logical_block = p * steps_per_partial + i
    n_groups = block_rows // group_rows
    g_sub = group_rows // _SUBLANES

    def block_sum(masked):
        def body(g, acc):
            start = pl.multiple_of(g * group_rows, group_rows)
            xs = x_ref[pl.ds(start, group_rows), :].astype(jnp.float32)
            ts = t_ref[pl.ds(start, group_rows), :].astype(jnp.float32)
            d = xs - ts
            sq = d * d
            if masked:
                # Only the OOB rows of a partial last block need masking; everything inside
                # `rows` is real data (the ragged tail was split off on the host side).
                row = g * group_rows + jax.lax.broadcasted_iota(
                    jnp.int32, (group_rows, _LANES), 0)
                sq = jnp.where(row < valid_rows_last, sq, jnp.float32(0.0))
            # Fold the group's rows into an (8, 128) vreg-resident carry with VPU adds only;
            # the cross-lane reduce is deferred to the jitted epilogue.
            return acc + jnp.sum(sq.reshape(g_sub, _SUBLANES, _LANES), axis=0)

        return jax.lax.fori_loop(0, n_groups, body,
                                 jnp.zeros((_SUBLANES, _LANES), jnp.float32),
                                 unroll=min(n_groups, 8))

    if mask_last:
        @pl.when(logical_block == num_blocks - 1)
        def _():
            out_ref[...] += block_sum(masked=True)

        @pl.when(logical_block != num_blocks - 1)
        def _():
            out_ref[...] += block_sum(masked=False)
    else:
        out_ref[...] += block_sum(masked=False)


def _mse_forward(x, target, *, max_block_rows=None, num_partials=None):
    """mean((x - target)^2); bulk of the reduction runs in the Pallas kernel."""
    assert x.shape == target.shape, (x.shape, target.shape)
    n = x.size
    if n == 0:
        return jnp.float32(0.0)

    itemsize = jnp.dtype(x.dtype).itemsize
    sub_mult = _SUBLANES * max(1, 4 // itemsize)      # 8 rows for f32, 16 for bf16
    chunk = sub_mult * _LANES

    xf = x.reshape(-1)
    tf = target.reshape(-1)
    rem = n % chunk
    n_main = n - rem

    # Ragged tail (< one vreg-chunk): plain jnp inside the same jit -- no full-array pad copy.
    if rem:
        d_tail = xf[n_main:].astype(jnp.float32) - tf[n_main:].astype(jnp.float32)
        tail_sum = jnp.sum(d_tail * d_tail)
    else:
        tail_sum = jnp.float32(0.0)

    if n_main == 0:
        return tail_sum / jnp.float32(n)

    num_tc, default_rows = _chip_config()
    if max_block_rows is None:
        max_block_rows = default_rows
    max_block_rows = max(_round_up(max_block_rows, sub_mult), sub_mult)

    rows = n_main // _LANES
    x_tiles = xf[:n_main].reshape(rows, _LANES)
    t_tiles = tf[:n_main].reshape(rows, _LANES)

    block_rows = min(max_block_rows, rows)
    num_blocks = -(-rows // block_rows)

    if num_partials is None:
        num_partials = num_tc
    if num_partials > 1 and num_blocks > 1 and num_blocks % num_partials != 0:
        # Nudge the block size down so both TensorCores get equal work (no phantom steps).
        cand = max(_round_up(-(-rows // _round_up(num_blocks, num_partials)), sub_mult),
                   sub_mult)
        cand_blocks = -(-rows // cand)
        if cand_blocks % num_partials == 0:
            block_rows, num_blocks = cand, cand_blocks
    if num_blocks % num_partials != 0:
        num_partials = 1            # single-TC chips / odd splits: no redundant DMA
    steps = num_blocks // num_partials

    mask_last = (num_blocks * block_rows) != rows
    valid_rows_last = rows - (num_blocks - 1) * block_rows
    group_rows = _pick_group_rows(block_rows, sub_mult)

    kernel = functools.partial(
        _sum_sq_diff_kernel,
        block_rows=block_rows,
        group_rows=group_rows,
        num_blocks=num_blocks,
        steps_per_partial=steps,
        valid_rows_last=valid_rows_last,
        mask_last=mask_last,
    )

    def in_index(p, i):
        return (p * steps + i, 0)

    cp_kwargs = dict(dimension_semantics=("parallel", "arbitrary"))
    live_bytes = 2 * 2 * block_rows * _LANES * itemsize   # 2 inputs x double buffer
    if live_bytes > 12 * 1024 * 1024:
        cp_kwargs["vmem_limit_bytes"] = 32 * 1024 * 1024

    partials = pl.pallas_call(
        kernel,
        out_shape=jax.ShapeDtypeStruct((num_partials * _SUBLANES, _LANES), jnp.float32),
        grid_spec=pltpu.PrefetchScalarGridSpec(
            num_scalar_prefetch=0,
            grid=(num_partials, steps),
            in_specs=[
                pl.BlockSpec((block_rows, _LANES), in_index),
                pl.BlockSpec((block_rows, _LANES), in_index),
            ],
            out_specs=pl.BlockSpec((_SUBLANES, _LANES), lambda p, i: (p, 0)),
        ),
        compiler_params=pltpu.CompilerParams(**cp_kwargs),
    )(x_tiles, t_tiles)

    # Tiny epilogue (fused under jit): cross-lane reduce of partials + tail + mean.
    return (jnp.sum(partials) + tail_sum) / jnp.float32(n)


@functools.partial(jax.jit, static_argnames=("max_block_rows", "num_partials"))
def _mse_forward_jit(x, target, max_block_rows=None, num_partials=None):
    return _mse_forward(x, target, max_block_rows=max_block_rows,
                        num_partials=num_partials)


@jax.custom_vjp
def _mse_loss(x, target):
    return _mse_forward(x, target)


def _mse_loss_fwd(x, target):
    return _mse_forward(x, target), (x, target)


def _mse_loss_bwd(res, g):
    x, target = res
    n = x.size
    diff = x.astype(jnp.float32) - target.astype(jnp.float32)
    gx = (2.0 / n) * g * diff
    return gx.astype(x.dtype), jnp.zeros_like(target)


_mse_loss.defvjp(_mse_loss_fwd, _mse_loss_bwd)


class ContentLoss:
    """JAX/Pallas port of the PyTorch ContentLoss module.

    `__call__(input)` returns `input` unchanged and stores the MSE against the fixed
    (detached) target in `self.loss`, mirroring the original forward.  The whole loss path
    is jitted; gradients w.r.t. the input flow through the attached custom VJP.
    """

    def __init__(self, target):
        self.target = jax.lax.stop_gradient(target)      # .detach()
        self._loss_fn = jax.jit(_mse_loss)
        self.loss = None

    def __call__(self, x):
        self.loss = self._loss_fn(x, self.target)
        return x


if __name__ == "__main__":
    root = jax.random.PRNGKey(0)

    def ref_mse(x, t):
        return jnp.mean((x.astype(jnp.float32) - t.astype(jnp.float32)) ** 2)

    def check(loss, ref, tag):
        assert jnp.allclose(loss, ref, rtol=1e-5, atol=1e-6), (tag, float(loss), float(ref))

    def make(seed, shape):
        k1, k2 = jax.random.split(jax.random.fold_in(root, seed))
        return (jax.random.normal(k1, shape, dtype=jnp.float32),
                jax.random.normal(k2, shape, dtype=jnp.float32))

    # 1) Primary case (NCHW conv feature map) through the module API + gradient check.
    x, t = make(0, (2, 4, 16, 16))
    mod = ContentLoss(t)
    out = jax.block_until_ready(mod(x))
    loss = jax.block_until_ready(mod.loss)
    check(loss, ref_mse(x, t), "module")
    assert jnp.array_equal(out, x)
    g = jax.block_until_ready(jax.jit(jax.grad(_mse_loss))(x, t))
    g_ref = (2.0 / x.size) * (x - t)
    assert jnp.allclose(g, g_ref, rtol=1e-5, atol=1e-6)

    # 2) Ragged case (numel % 1024 != 0): kernel main part + jnp tail, no pad copy.
    x, t = make(1, (2, 3, 17, 19))
    check(jax.block_until_ready(_mse_forward_jit(x, t)), ref_mse(x, t), "ragged")

    # 3) Forced small block with odd block count: masked last block, single partial.
    x, t = make(2, (2, 4, 32, 32))
    check(jax.block_until_ready(_mse_forward_jit(x, t, max_block_rows=24, num_partials=1)),
          ref_mse(x, t), "masked-odd")

    # 4) Forced 2-partial split with a masked last block (exercises the megacore path).
    check(jax.block_until_ready(_mse_forward_jit(x, t, max_block_rows=40, num_partials=2)),
          ref_mse(x, t), "two-partial-masked")

    # 4b) Forced 2-partial split, even blocks, multi-step accumulation per partial.
    check(jax.block_until_ready(_mse_forward_jit(x, t, max_block_rows=16, num_partials=2)),
          ref_mse(x, t), "two-partial")

    # 5) Tiny input (< 1024 elements): pure-jnp fallback path.
    x, t = make(3, (2, 3, 7, 5))
    check(jax.block_until_ready(_mse_forward_jit(x, t)), ref_mse(x, t), "tiny")

    print("KERNEL_OK")
</pallas_src>

<mosaic_0001>
module attributes {stable_mosaic.version = 11 : i64} {
  func.func @_sum_sq_diff_kernel(%arg0: i32, %arg1: i32, %arg2: memref<16x128xf32, #tpu.memory_space<vmem>>, %arg3: memref<16x128xf32, #tpu.memory_space<vmem>>, %arg4: memref<8x128xf32, #tpu.memory_space<vmem>>) attributes {dimension_semantics = [#tpu.dimension_semantics<parallel>, #tpu.dimension_semantics<arbitrary>], iteration_bounds = array<i64: 1, 1>, scalar_prefetch = 0 : i64, scratch_operands = 0 : i64, tpu.core_type = #tpu.core_type<tc>, window_params = [{transform_indices = @transform_0, window_bounds = array<i64: 16, 128>}, {transform_indices = @transform_1, window_bounds = array<i64: 16, 128>}, {transform_indices = @transform_2, window_bounds = array<i64: 8, 128>}]} {
    %c0_i32 = arith.constant 0 : i32
    %0 = arith.cmpi eq, %arg1, %c0_i32 : i32
    %1 = arith.extui %0 : i1 to i32
    %c0_i32_0 = arith.constant 0 : i32
    %2 = arith.cmpi ne, %1, %c0_i32_0 : i32
    scf.if %2 {
      %cst_8 = arith.constant 0.000000e+00 : f32
      %18 = vector.broadcast %cst_8 : f32 to vector<8x128xf32>
      %c0_9 = arith.constant 0 : index
      %c0_10 = arith.constant 0 : index
      %19 = vector.load %arg4[%c0_9, %c0_10] : memref<8x128xf32, #tpu.memory_space<vmem>>, vector<8x128xf32>
      tpu.vector_store %arg4[%c0_9, %c0_10], %18 {strides = array<i32>} : memref<8x128xf32, #tpu.memory_space<vmem>>, vector<8x128xf32>,
    } else {
    }
    %c0 = arith.constant 0 : index
    %c0_1 = arith.constant 0 : index
    %3 = vector.load %arg4[%c0, %c0_1] : memref<8x128xf32, #tpu.memory_space<vmem>>, vector<8x128xf32>
    %cst = arith.constant 0.000000e+00 : f32
    %4 = vector.broadcast %cst : f32 to vector<8x128xf32>
    %c0_i32_2 = arith.constant 0 : i32
    %c16_i32 = arith.constant 16 : i32
    %5 = arith.muli %c0_i32_2, %c16_i32 : i32
    %6 = tpu.assume_multiple %5, 16 : i32
    %7 = arith.index_cast %6 : i32 to index
    %c0_3 = arith.constant 0 : index
    %8 = vector.load %arg2[%7, %c0_3] : memref<16x128xf32, #tpu.memory_space<vmem>>, vector<16x128xf32>
    %9 = arith.index_cast %6 : i32 to index
    %c0_4 = arith.constant 0 : index
    %10 = vector.load %arg3[%9, %c0_4] : memref<16x128xf32, #tpu.memory_space<vmem>>, vector<16x128xf32>
    %11 = arith.subf %8, %10 : vector<16x128xf32>
    %12 = arith.mulf %11, %11 : vector<16x128xf32>
    %13 = vector.shape_cast %12 : vector<16x128xf32> to vector<2x8x128xf32>
    %cst_5 = arith.constant dense<0.000000e+00> : vector<8x128xf32>
    %14 = vector.multi_reduction <add>, %13, %cst_5 [0] : vector<2x8x128xf32> to vector<8x128xf32>
    %15 = arith.addf %4, %14 : vector<8x128xf32>
    %c1_i32 = arith.constant 1 : i32
    %16 = arith.addf %3, %15 : vector<8x128xf32>
    %c0_6 = arith.constant 0 : index
    %c0_7 = arith.constant 0 : index
    %17 = vector.load %arg4[%c0_6, %c0_7] : memref<8x128xf32, #tpu.memory_space<vmem>>, vector<8x128xf32>
    tpu.vector_store %arg4[%c0_6, %c0_7], %16 {strides = array<i32>} : memref<8x128xf32, #tpu.memory_space<vmem>>, vector<8x128xf32>,
    return
  }
  func.func @transform_0(%arg0: i32, %arg1: i32) -> (i32, i32) {
    %c1_i32 = arith.constant 1 : i32
    %0 = arith.muli %arg0, %c1_i32 : i32
    %1 = arith.addi %0, %arg1 : i32
    %c0_i32 = arith.constant 0 : i32
    %c0_i32_0 = arith.constant 0 : i32
    return %1, %c0_i32 : i32, i32
  }
  func.func @transform_1(%arg0: i32, %arg1: i32) -> (i32, i32) {
    %c1_i32 = arith.constant 1 : i32
    %0 = arith.muli %arg0, %c1_i32 : i32
    %1 = arith.addi %0, %arg1 : i32
    %c0_i32 = arith.constant 0 : i32
    %c0_i32_0 = arith.constant 0 : i32
    return %1, %c0_i32 : i32, i32
  }
  func.func @transform_2(%arg0: i32, %arg1: i32) -> (i32, i32) {
    %c0_i32 = arith.constant 0 : i32
    %c0_i32_0 = arith.constant 0 : i32
    return %arg0, %c0_i32 : i32, i32
  }
}

</mosaic_0001>

<llo_original>
// kernel: _mse_loss.1
$region0: #{_mse_loss.1}
  #allocation0 [shape = 'u32[]', space=smem, size = 0x4, offset = 0x4, fixed_abs, tag = 'smem constant byte address 0x4 - core index']
  #allocation1 [shape = 'u32[144,128]{1,0:T(1,128)}', space=vmem, size = 0x12000, scoped, tag = 'internal scratch']
  %s0 = inlined_call_operand.vmem [shape: f32[16,128], index: 0, kind: input, shape index: {}]
  %s1 = inlined_call_operand.vmem [shape: f32[16,128], index: 1, kind: input, shape index: {}]
  %s2 = inlined_call_operand.vmem [shape: f32[8,128], index: 2, kind: output, shape index: {}]
  %s3 = sld [smem:[#allocation0]]
  $region22: #{_mse_loss.1} parent=0
    _
  %s5 = ssub.s32 1, %s3
  %s6 = scalar_select 0, %s5, %s3
  // Predicated region
  $region2: #{_mse_loss.1} parent=0 // pred_check
    _
  $region3: #{_mse_loss.1} parent=0 // pred_check_branch
    %8 = sbr.rel (0) target = $region5
  $region4: #{_mse_loss.1} parent=0 // pred_region
    %s9 = sadd.s32 0, 0
    %s10 = smul.u32 2, %s9
    %p11 = scmp.lt.s32.totalorder %s10, 1
    %s12 = scalar_select %p11, %s10, 1
    %s13 = smul.addr %s12, 8
    %s14 = scalar_lea.vmem %s0, %s13
    %s15 = sadd.s32 0, 0
    %s16 = smul.u32 2, %s15
  $region5: #{_mse_loss.1} parent=0 // pred_fallthru
    _
  // Predicated region
  $region6: #{_mse_loss.1} parent=0 // pred_check
    _
  $region7: #{_mse_loss.1} parent=0 // pred_check_branch
    %18 = sbr.rel (0) target = $region9
  $region8: #{_mse_loss.1} parent=0 // pred_region
    %s19 = sadd.s32 0, 0
    %s20 = smul.u32 2, %s19
    %p21 = scmp.lt.s32.totalorder %s20, 1
    %s22 = scalar_select %p21, %s20, 1
    %s23 = smul.addr %s22, 8
    %s24 = scalar_lea.vmem %s1, %s23
    %s25 = sadd.s32 0, 0
    %s26 = smul.u32 2, %s25
  $region9: #{_mse_loss.1} parent=0 // pred_fallthru
    _
  %s27 = sadd.s32 0, 0
  %s28 = smul.u32 2, %s27
  %p29 = scmp.lt.s32.totalorder %s28, 1
  %s30 = scalar_select %p29, %s28, 1
  %s31 = smul.addr %s30, 8
  %s32 = scalar_lea.vmem %s0, %s31
  %s33 = sadd.s32 0, 0
  %s34 = smul.u32 2, %s33
  %p35 = scmp.lt.s32.totalorder %s34, 1
  %s36 = scalar_select %p35, %s34, 1
  %s37 = smul.addr %s36, 8
  %s38 = scalar_lea.vmem %s1, %s37
  %s39 = sadd.s32 0, 0
  %s40 = smul.u32 2, %s39
  %p41 = scmp.lt.s32.totalorder %s40, 1
  %s42 = scalar_select %p41, %s40, 1
  %s43 = smul.addr %s42, 8
  %s44 = scalar_lea.vmem %s0, %s43
  %s45 = sadd.s32 0, 0
  %s46 = smul.u32 2, %s45
  %s47 = sadd.s32 0, 0
  %s48 = smul.u32 2, %s47
  %p49 = scmp.lt.s32.totalorder %s48, 1
  %s50 = scalar_select %p49, %s48, 1
  %s51 = smul.addr %s50, 8
  %s52 = scalar_lea.vmem %s1, %s51
  %s53 = sadd.s32 0, 0
  %s54 = smul.u32 2, %s53
  %p55 = scmp.eq.s32.totalorder 0, 0
  // Predicated region
  $region10: #{_mse_loss.1} parent=0 // pred_check
    %p56 = pneg %p55
  $region11: #{_mse_loss.1} parent=0 // pred_check_branch
    %58 = sbr.rel (%p56) target = $region13
  $region12: #{_mse_loss.1} parent=0 // pred_region
    %59 = vst [vmem:[%s2] sm:$0xff] 0.0
  $region13: #{_mse_loss.1} parent=0 // pred_fallthru
    _
  %v60 = vld [vmem:[%s2] sm:$0xff]
  %v61 = vld [vmem:[%s44] sm:$0xff]
  %v62 = vld [vmem:[%s44 + $0x8] sm:$0xff]
  %v63 = vld [vmem:[%s52] sm:$0xff]
  %v64 = vld [vmem:[%s52 + $0x8] sm:$0xff]
  %v65 = vsub.f32 %v61, %v63
  %v66 = vsub.f32 %v62, %v64
  %v67 = vmul.f32 %v65, %v65
  %v68 = vmul.f32 %v66, %v66
  %v69 = vadd.f32 %v67, %v68
  %v70 = vadd.f32 %v69, 0.0
  %v71 = vadd.f32 %v60, %v70
  %72 = vst [vmem:[%s2] sm:$0xff] %v71
  // Predicated region
  $region14: #{_mse_loss.1} parent=0 // pred_check
    _
  $region15: #{_mse_loss.1} parent=0 // pred_check_branch
    %74 = sbr.rel (0) target = $region17
  $region16: #{_mse_loss.1} parent=0 // pred_region
    _
  $region17: #{_mse_loss.1} parent=0 // pred_fallthru
    _
  // Predicated region
  $region18: #{_mse_loss.1} parent=0 // pred_check
    _
  $region19: #{_mse_loss.1} parent=0 // pred_check_branch
    %76 = sbr.rel (0) target = $region21
  $region20: #{_mse_loss.1} parent=0 // pred_region
    _
  $region21: #{_mse_loss.1} parent=0 // pred_fallthru
    _

</llo_original>
